<compile_context>
chip_gen: v7x
topology: tpu7x:2x2x1
jax: 0.10.0
libtpu: 0.0.40
codegen_flags: <defaults>
</compile_context>

<pallas_src>
import jax
import jax.numpy as jnp
from jax.experimental import pallas as pl
from jax.experimental.pallas import tpu as pltpu


def _make_prompt_kernel(n_ctx: int):
    """Returns a kernel that assembles one block of CB classes' prompts."""

    def kernel(ctx_ref, prefix_ref, suffix_ref, out_ref):
        # ctx_ref    : (n_ctx,        ctx_dim)  VMEM (shared across all classes)
        # prefix_ref : (CB, 1,        ctx_dim)  VMEM
        # suffix_ref : (CB, suf_len,  ctx_dim)  VMEM
        # out_ref    : (CB, seq_len,  ctx_dim)  VMEM
        cb = out_ref.shape[0]
        ctx_dim = out_ref.shape[2]

        # [SOS] embeddings for the whole class block.
        out_ref[:, 0:1, :] = prefix_ref[...]
        # Learnable context vectors, broadcast once across the class-block axis.
        out_ref[:, 1:1 + n_ctx, :] = jnp.broadcast_to(
            ctx_ref[...][None, :, :], (cb, n_ctx, ctx_dim))
        # Class-name + [EOS] + padding embeddings.
        out_ref[:, 1 + n_ctx:, :] = suffix_ref[...]

    return kernel


def _choose_class_block(n_cls, seq_len, suf_len, ctx_dim, itemsize,
                        vmem_budget_bytes, max_cb=64):
    """Pick how many classes to assemble per grid step, bounded by a VMEM budget."""
    # Per-class VMEM bytes per pipeline stage (prefix + suffix + output blocks),
    # times 2 for double-buffering.
    per_class = (1 + suf_len + seq_len) * ctx_dim * itemsize * 2
    cb = max(1, min(max_cb, vmem_budget_bytes // max(per_class, 1), n_cls))
    # Keep at least 2 grid steps when possible so the parallel class axis can be
    # sharded across both TensorCores on v7x.
    if cb >= n_cls and n_cls > 1:
        cb = pl.cdiv(n_cls, 2)
    return int(cb)


def vl_prompt_learner_forward(ctx, token_prefix, token_suffix,
                              *, class_block=None,
                              vmem_budget_bytes=32 * 1024 * 1024):
    """Pallas equivalent of VLPromptLearner.forward().

    ctx          : (n_ctx, ctx_dim)            learnable context vectors
    token_prefix : (n_cls, 1, ctx_dim)         frozen [SOS] embeddings
    token_suffix : (n_cls, suf_len, ctx_dim)   frozen class/EOS/pad embeddings
    returns      : (n_cls, 1 + n_ctx + suf_len, ctx_dim)
    """
    n_ctx, ctx_dim = ctx.shape
    n_cls = token_prefix.shape[0]
    suf_len = token_suffix.shape[1]
    seq_len = 1 + n_ctx + suf_len

    # Normalize dtypes explicitly: in CLIP everything is clip_model.dtype; if the
    # learnable ctx arrives in a different dtype, cast it to the frozen-embedding
    # dtype so the kernel is a pure copy (no implicit per-store casts).
    out_dtype = token_prefix.dtype
    ctx = ctx.astype(out_dtype)
    token_suffix = token_suffix.astype(out_dtype)
    itemsize = jnp.dtype(out_dtype).itemsize

    if class_block is None:
        class_block = _choose_class_block(
            n_cls, seq_len, suf_len, ctx_dim, itemsize, vmem_budget_bytes)
    class_block = int(max(1, min(class_block, n_cls)))

    grid = (pl.cdiv(n_cls, class_block),)
    kernel = _make_prompt_kernel(n_ctx)

    return pl.pallas_call(
        kernel,
        out_shape=jax.ShapeDtypeStruct((n_cls, seq_len, ctx_dim), out_dtype),
        grid_spec=pl.GridSpec(
            grid=grid,
            in_specs=[
                # Shared learnable context: same block for every grid step.
                pl.BlockSpec((n_ctx, ctx_dim), lambda i: (0, 0)),
                # Per-class-block frozen [SOS] embeddings.
                pl.BlockSpec((class_block, 1, ctx_dim), lambda i: (i, 0, 0)),
                # Per-class-block frozen class/EOS/pad embeddings.
                pl.BlockSpec((class_block, suf_len, ctx_dim), lambda i: (i, 0, 0)),
            ],
            out_specs=pl.BlockSpec((class_block, seq_len, ctx_dim),
                                   lambda i: (i, 0, 0)),
        ),
        compiler_params=pltpu.CompilerParams(
            dimension_semantics=("parallel",),
            vmem_limit_bytes=48 * 1024 * 1024,
        ),
    )(ctx, token_prefix, token_suffix)


if __name__ == "__main__":
    # Small synthetic shapes consistent with the module:
    #   n_cls classes, n_ctx learnable context tokens, seq_len total tokens,
    #   ctx_dim transformer width.
    n_cls = 4
    n_ctx = 4
    ctx_dim = 128
    seq_len = 16                      # stand-in for CLIP's 77-token context
    suf_len = seq_len - 1 - n_ctx     # = 11

    key = jax.random.PRNGKey(0)
    k_ctx, k_pre, k_suf = jax.random.split(key, 3)

    # nn.init.normal_(ctx_vectors, std=0.02)
    ctx = (0.02 * jax.random.normal(k_ctx, (n_ctx, ctx_dim))).astype(jnp.float32)
    # register_buffer('token_prefix', embedding[:, :1, :]) — synthetic frozen embeddings
    token_prefix = jax.random.normal(k_pre, (n_cls, 1, ctx_dim), dtype=jnp.float32)
    # register_buffer('token_suffix', embedding[:, 1+n_ctx:, :])
    token_suffix = jax.random.normal(k_suf, (n_cls, suf_len, ctx_dim), dtype=jnp.float32)

    prompts = vl_prompt_learner_forward(ctx, token_prefix, token_suffix)
    prompts = jax.block_until_ready(prompts)

    # Pure-JAX reference: expand ctx to (n_cls, n_ctx, ctx_dim) and concat on seq axis.
    ctx_expanded = jnp.broadcast_to(ctx[None, :, :], (n_cls, n_ctx, ctx_dim))
    ref = jnp.concatenate([token_prefix, ctx_expanded, token_suffix], axis=1)

    assert prompts.shape == (n_cls, seq_len, ctx_dim), prompts.shape
    assert prompts.dtype == ref.dtype
    assert bool(jnp.allclose(prompts, ref)), "mismatch vs reference"

    print("KERNEL_OK")
</pallas_src>

<mosaic_0001>
module attributes {stable_mosaic.version = 11 : i64} {
  func.func @kernel(%arg0: i32, %arg1: memref<4x128xf32, #tpu.memory_space<vmem>>, %arg2: memref<2x1x128xf32, #tpu.memory_space<vmem>>, %arg3: memref<2x11x128xf32, #tpu.memory_space<vmem>>, %arg4: memref<2x16x128xf32, #tpu.memory_space<vmem>>) attributes {dimension_semantics = [#tpu.dimension_semantics<parallel>], iteration_bounds = array<i64: 2>, scalar_prefetch = 0 : i64, scratch_operands = 0 : i64, tpu.core_type = #tpu.core_type<tc>, window_params = [{pipeline_mode = #tpu.pipeline_mode<synchronous>, transform_indices = @transform_0, window_bounds = array<i64: 4, 128>}, {transform_indices = @transform_1, window_bounds = array<i64: 2, 1, 128>}, {transform_indices = @transform_2, window_bounds = array<i64: 2, 11, 128>}, {transform_indices = @transform_3, window_bounds = array<i64: 2, 16, 128>}]} {
    %c0 = arith.constant 0 : index
    %c0_0 = arith.constant 0 : index
    %c0_1 = arith.constant 0 : index
    %0 = vector.load %arg2[%c0, %c0_0, %c0_1] : memref<2x1x128xf32, #tpu.memory_space<vmem>>, vector<2x1x128xf32>
    %c0_2 = arith.constant 0 : index
    %c0_3 = arith.constant 0 : index
    %c0_4 = arith.constant 0 : index
    %1 = vector.load %arg4[%c0_2, %c0_3, %c0_4] : memref<2x16x128xf32, #tpu.memory_space<vmem>>, vector<2x1x128xf32>
    tpu.vector_store %arg4[%c0_2, %c0_3, %c0_4], %0 {strides = array<i32>} : memref<2x16x128xf32, #tpu.memory_space<vmem>>, vector<2x1x128xf32>,
    %c0_5 = arith.constant 0 : index
    %c0_6 = arith.constant 0 : index
    %2 = vector.load %arg1[%c0_5, %c0_6] : memref<4x128xf32, #tpu.memory_space<vmem>>, vector<4x128xf32>
    %3 = vector.shape_cast %2 : vector<4x128xf32> to vector<1x4x128xf32>
    %4 = vector.shape_cast %3 : vector<1x4x128xf32> to vector<1x4x128xf32>
    %5 = vector.broadcast %4 : vector<1x4x128xf32> to vector<2x4x128xf32>
    %c0_7 = arith.constant 0 : index
    %c1 = arith.constant 1 : index
    %c0_8 = arith.constant 0 : index
    %6 = vector.load %arg4[%c0_7, %c1, %c0_8] : memref<2x16x128xf32, #tpu.memory_space<vmem>>, vector<2x4x128xf32>
    tpu.vector_store %arg4[%c0_7, %c1, %c0_8], %5 {strides = array<i32>} : memref<2x16x128xf32, #tpu.memory_space<vmem>>, vector<2x4x128xf32>,
    %c0_9 = arith.constant 0 : index
    %c0_10 = arith.constant 0 : index
    %c0_11 = arith.constant 0 : index
    %7 = vector.load %arg3[%c0_9, %c0_10, %c0_11] : memref<2x11x128xf32, #tpu.memory_space<vmem>>, vector<2x11x128xf32>
    %c0_12 = arith.constant 0 : index
    %c5 = arith.constant 5 : index
    %c0_13 = arith.constant 0 : index
    %8 = vector.load %arg4[%c0_12, %c5, %c0_13] : memref<2x16x128xf32, #tpu.memory_space<vmem>>, vector<2x11x128xf32>
    tpu.vector_store %arg4[%c0_12, %c5, %c0_13], %7 {strides = array<i32>} : memref<2x16x128xf32, #tpu.memory_space<vmem>>, vector<2x11x128xf32>,
    return
  }
  func.func @transform_0(%arg0: i32) -> (i32, i32) {
    %c0_i32 = arith.constant 0 : i32
    %c0_i32_0 = arith.constant 0 : i32
    %c0_i32_1 = arith.constant 0 : i32
    return %c0_i32, %c0_i32_0 : i32, i32
  }
  func.func @transform_1(%arg0: i32) -> (i32, i32, i32) {
    %c0_i32 = arith.constant 0 : i32
    %c0_i32_0 = arith.constant 0 : i32
    %c0_i32_1 = arith.constant 0 : i32
    return %arg0, %c0_i32, %c0_i32_0 : i32, i32, i32
  }
  func.func @transform_2(%arg0: i32) -> (i32, i32, i32) {
    %c0_i32 = arith.constant 0 : i32
    %c0_i32_0 = arith.constant 0 : i32
    %c0_i32_1 = arith.constant 0 : i32
    return %arg0, %c0_i32, %c0_i32_0 : i32, i32, i32
  }
  func.func @transform_3(%arg0: i32) -> (i32, i32, i32) {
    %c0_i32 = arith.constant 0 : i32
    %c0_i32_0 = arith.constant 0 : i32
    %c0_i32_1 = arith.constant 0 : i32
    return %arg0, %c0_i32, %c0_i32_0 : i32, i32, i32
  }
}

</mosaic_0001>

<llo_original>
// kernel: tpu_custom_call.1
$region0: #{tpu_custom_call.1}
  #allocation0 [shape = 'u32[]', space=smem, size = 0x4, offset = 0x4, fixed_abs, tag = 'smem constant byte address 0x4 - core index']
  #allocation1 [shape = 'u32[144,128]{1,0:T(1,128)}', space=vmem, size = 0x12000, scoped, tag = 'internal scratch']
  %s0 = inlined_call_operand.vmem [shape: f32[4,128], index: 0, kind: input, shape index: {}]
  %s1 = inlined_call_operand.vmem [shape: f32[4,1,128], index: 1, kind: input, shape index: {}]
  %s2 = inlined_call_operand.vmem [shape: f32[4,11,128], index: 2, kind: input, shape index: {}]
  %s3 = inlined_call_operand.hbm [shape: f32[4,16,128], index: 3, kind: output, shape index: {}]
  %s4 = sld [smem:[#allocation0]]
  $region45: #{tpu_custom_call.1} parent=0
    _
  %s6 = ssub.s32 1, %s4
  %s7 = scalar_select 0, %s6, %s4
  $region1: #{tpu_custom_call.1} parent=0
    #allocation2 [shape = 'u8[32768]{0}', space=vmem, size = 0x8000, scoped, tag = 'output window, operand 0']
    #allocation3 [shape = 's32[2]{0}', space=sflag, size = 0x8, scoped, tag = 'scoped memory for tpu_custom_call.1']
    %8 = vsyncpa [#allocation3], 0
    %s9 = scalar_lea.sflag [#allocation3], 1
    %10 = vsyncpa %s9, 0
    loop: start=0, step=1, limit=4
    $region2: #{tpu_custom_call.1} parent=1 // loop_pre_header
      _
    $region3: #{tpu_custom_call.1} parent=1 // loop_header
      %s12 = sphi 0, %s16
      %p13 = scmp.ge.s32.totalorder %s12, 4
      %s20 = sphi 0, %s20
      %s22 = sphi 0, %s20
      %s23 = sphi 0, %s22
      %s37 = sphi 0, %s23
      %s43 = sphi 0, %s45
      %s46 = sphi 0, %s43
      %s47 = sphi 0, %s46
      %s63 = sphi 0, %s47
      %s69 = sphi 0, %s71
      %s72 = sphi 0, %s69
      %s73 = sphi 0, %s72
      %s89 = sphi 0, %s73
      %s95 = sphi 0, %s97
      %s98 = sphi 0, %s95
      %s99 = sphi 0, %s98
      %s115 = sphi 0, %s99
    $region4: #{tpu_custom_call.1} parent=1 // loop_header_branch
      %15 = sbr.rel (%p13) target = $region8
    $region5: #{tpu_custom_call.1} parent=1 // loop_body
      %s17 = ssub.s32 %s12, 1
      %s18 = ssub.s32 %s12, 2
      %s19 = sadd.s32 %s12, 1
      %s21 = sadd.s32 %s20, 1
      %p24 = scmp.eq.s32.totalorder %s12, 1
      %p25 = scmp.ne.s32.totalorder %s20, %s22
      %p26 = scmp.eq.s32.totalorder %s12, 0
      %p27 = por %p25, %p26
      %p28 = scmp.ne.s32.totalorder %s20, %s22
      %p29 = scmp.eq.s32.totalorder %s17, 1
      %p30 = por %p28, %p29
      %p31 = scmp.ne.s32.totalorder %s22, %s23
      %p32 = scmp.eq.s32.totalorder %s17, 0
      %p33 = por %p31, %p32
      %p34 = scmp.ne.s32.totalorder %s22, %s23
      %p35 = scmp.eq.s32.totalorder %s18, 1
      %p36 = por %p34, %p35
      %p38 = scmp.ne.s32.totalorder %s23, %s37
      %p39 = scmp.eq.s32.totalorder %s18, 0
      %p40 = por %p38, %p39
      %s41 = ssub.s32 %s12, %s19
      %p42 = scmp.eq.s32.totalorder %s41, 0
      %s44 = sadd.s32 %s43, 1
      %s45 = scalar_select %p42, %s43, %s44
      %p48 = pneg %p42
      %p49 = scmp.eq.s32.totalorder %s12, 1
      %p50 = por %p48, %p49
      %p51 = scmp.ne.s32.totalorder %s43, %s46
      %p52 = scmp.eq.s32.totalorder %s12, 0
      %p53 = por %p51, %p52
      %p54 = scmp.ne.s32.totalorder %s43, %s46
      %p55 = scmp.eq.s32.totalorder %s17, 1
      %p56 = por %p54, %p55
      %p57 = scmp.ne.s32.totalorder %s46, %s47
      %p58 = scmp.eq.s32.totalorder %s17, 0
      %p59 = por %p57, %p58
      %p60 = scmp.ne.s32.totalorder %s46, %s47
      %p61 = scmp.eq.s32.totalorder %s18, 1
      %p62 = por %p60, %p61
      %p64 = scmp.ne.s32.totalorder %s47, %s63
      %p65 = scmp.eq.s32.totalorder %s18, 0
      %p66 = por %p64, %p65
      %s67 = ssub.s32 %s12, %s19
      %p68 = scmp.eq.s32.totalorder %s67, 0
      %s70 = sadd.s32 %s69, 1
      %s71 = scalar_select %p68, %s69, %s70
      %p74 = pneg %p68
      %p75 = scmp.eq.s32.totalorder %s12, 1
      %p76 = por %p74, %p75
      %p77 = scmp.ne.s32.totalorder %s69, %s72
      %p78 = scmp.eq.s32.totalorder %s12, 0
      %p79 = por %p77, %p78
      %p80 = scmp.ne.s32.totalorder %s69, %s72
      %p81 = scmp.eq.s32.totalorder %s17, 1
      %p82 = por %p80, %p81
      %p83 = scmp.ne.s32.totalorder %s72, %s73
      %p84 = scmp.eq.s32.totalorder %s17, 0
      %p85 = por %p83, %p84
      %p86 = scmp.ne.s32.totalorder %s72, %s73
      %p87 = scmp.eq.s32.totalorder %s18, 1
      %p88 = por %p86, %p87
      %p90 = scmp.ne.s32.totalorder %s73, %s89
      %p91 = scmp.eq.s32.totalorder %s18, 0
      %p92 = por %p90, %p91
      %s93 = ssub.s32 %s12, %s19
      %p94 = scmp.eq.s32.totalorder %s93, 0
      %s96 = sadd.s32 %s95, 1
      %s97 = scalar_select %p94, %s95, %s96
      %p100 = pneg %p94
      %p101 = scmp.eq.s32.totalorder %s12, 1
      %p102 = por %p100, %p101
      %p103 = scmp.ne.s32.totalorder %s95, %s98
      %p104 = scmp.eq.s32.totalorder %s12, 0
      %p105 = por %p103, %p104
      %p106 = scmp.ne.s32.totalorder %s95, %s98
      %p107 = scmp.eq.s32.totalorder %s17, 1
      %p108 = por %p106, %p107
      %p109 = scmp.ne.s32.totalorder %s98, %s99
      %p110 = scmp.eq.s32.totalorder %s17, 0
      %p111 = por %p109, %p110
      %p112 = scmp.ne.s32.totalorder %s98, %s99
      %p113 = scmp.eq.s32.totalorder %s18, 1
      %p114 = por %p112, %p113
      %p116 = scmp.ne.s32.totalorder %s99, %s115
      %p117 = scmp.eq.s32.totalorder %s18, 0
      %p118 = por %p116, %p117
      %p119 = scmp.le.s32.totalorder 1, %s12
      %p120 = scmp.lt.s32.totalorder %s12, 3
      %p121 = pnand %p119, %p120
      %p122 = pneg %p121
      // Predicated region
      $region9: #{tpu_custom_call.1} parent=5 // pred_check
        _
      $region10: #{tpu_custom_call.1} parent=5 // pred_check_branch
        %124 = sbr.rel (%p121) target = $region12
      $region11: #{tpu_custom_call.1} parent=5 // pred_region
        %s125 = ssub.s32 %s12, 1
        // Predicated region
        $region13: #{tpu_custom_call.1} parent=11 // pred_check
          %p126 = pneg %p33
        $region14: #{tpu_custom_call.1} parent=11 // pred_check_branch
          %128 = sbr.rel (%p126) target = $region16
        $region15: #{tpu_custom_call.1} parent=11 // pred_region
          _
        $region16: #{tpu_custom_call.1} parent=11 // pred_fallthru
          _
      $region12: #{tpu_custom_call.1} parent=5 // pred_fallthru
        _
      %p129 = scmp.lt.s32.totalorder %s12, 2
      // Predicated region
      $region17: #{tpu_custom_call.1} parent=5 // pred_check
        %p130 = pneg %p129
      $region18: #{tpu_custom_call.1} parent=5 // pred_check_branch
        %132 = sbr.rel (%p130) target = $region20
      $region19: #{tpu_custom_call.1} parent=5 // pred_region
        // Predicated region
        $region21: #{tpu_custom_call.1} parent=19 // pred_check
          %p133 = pneg %p53
        $region22: #{tpu_custom_call.1} parent=19 // pred_check_branch
          %135 = sbr.rel (%p133) target = $region24
        $region23: #{tpu_custom_call.1} parent=19 // pred_region
          %s136 = smul.u32 2, %s12
          %p137 = scmp.lt.s32.totalorder %s136, 3
          %s138 = scalar_select %p137, %s136, 3
          %s139 = scalar_lea.vmem %s1, %s138
          %s140 = smul.u32 2, %s12
        $region24: #{tpu_custom_call.1} parent=19 // pred_fallthru
          _
        // Predicated region
        $region25: #{tpu_custom_call.1} parent=19 // pred_check
          %p141 = pneg %p79
        $region26: #{tpu_custom_call.1} parent=19 // pred_check_branch
          %143 = sbr.rel (%p141) target = $region28
        $region27: #{tpu_custom_call.1} parent=19 // pred_region
          %s144 = smul.u32 2, %s12
          %p145 = scmp.lt.s32.totalorder %s144, 3
          %s146 = scalar_select %p145, %s144, 3
          %s147 = smul.addr %s146, 2
          %s148 = smul.addr %s147, 8
          %s149 = scalar_lea.vmem %s2, %s148
          %s150 = smul.u32 2, %s12
        $region28: #{tpu_custom_call.1} parent=19 // pred_fallthru
          _
      $region20: #{tpu_custom_call.1} parent=5 // pred_fallthru
        _
      %p151 = scmp.le.s32.totalorder 1, %s12
      %p152 = scmp.lt.s32.totalorder %s12, 3
      %p153 = pnand %p151, %p152
      %p154 = pneg %p153
      // Predicated region
      $region29: #{tpu_custom_call.1} parent=5 // pred_check
        _
      $region30: #{tpu_custom_call.1} parent=5 // pred_check_branch
        %156 = sbr.rel (%p153) target = $region32
      $region31: #{tpu_custom_call.1} parent=5 // pred_region
        %s157 = ssub.s32 %s12, 1
        %p158 = pneg %p33
        %p159 = pneg %p30
        %s160 = smul.u32 2, %s17
        %p161 = scmp.lt.s32.totalorder %s160, 3
        %s162 = scalar_select %p161, %s160, 3
        %s163 = scalar_lea.vmem %s1, %s162
        %p164 = pneg %p59
        %p165 = pneg %p56
        %s166 = smul.u32 2, %s17
        %p167 = scmp.lt.s32.totalorder %s166, 3
        %s168 = scalar_select %p167, %s166, 3
        %s169 = smul.addr %s168, 2
        %s170 = smul.addr %s169, 8
        %s171 = scalar_lea.vmem %s2, %s170
        %p172 = pneg %p85
        %p173 = pneg %p82
        %p174 = pneg %p111
        %p175 = pneg %p108
        %s176 = sand.u32 %s98, 1
        %s177 = scalar_lea.sflag [#allocation3], %s176
        %s178 = sand.u32 %s98, 1
        %s179 = smul.addr %s178, 32
        %s180 = scalar_lea.vmem [#allocation2], %s179
        %s181 = smul.u32 2, %s17
        %p182 = scmp.lt.s32.totalorder %s181, 3
        %s183 = scalar_select %p182, %s181, 3
        %s184 = scalar_lea.vmem %s1, %s183
        %s185 = smul.u32 2, %s17
        %s186 = smul.u32 2, %s17
        %p187 = scmp.lt.s32.totalorder %s186, 3
        %s188 = scalar_select %p187, %s186, 3
        %s189 = smul.addr %s188, 2
        %s190 = smul.addr %s189, 8
        %s191 = scalar_lea.vmem %s2, %s190
        %s192 = smul.u32 2, %s17
        %s193 = smul.u32 2, %s17
        %v194 = vld [vmem:[%s184] sm:$0x1]
        %v195 = vld [vmem:[%s184 + $0x1] sm:$0x1]
        %196 = vst [vmem:[%s180] sm:$0x1] %v194
        %197 = vst [vmem:[%s180 + $0x10] sm:$0x1] %v195
        %v198 = vld [vmem:[%s0] sm:$0xf]
        %199 = vst [vmem:[%s180 + $0x1] sm:$0xf] %v198
        %200 = vst [vmem:[%s180 + $0x11] sm:$0xf] %v198
        %v201 = vld [vmem:[%s191] sm:$0xff]
        %v202 = vld [vmem:[%s191 + $0x8] sm:$0x7]
        %v203 = vld [vmem:[%s191 + $0x10] sm:$0xff]
        %v204 = vld [vmem:[%s191 + $0x18] sm:$0x7]
        %205 = vst [vmem:[%s180 + $0x5] sm:$0xff] %v201
        %206 = vst [vmem:[%s180 + $0xd] sm:$0x7] %v202
        %207 = vst [vmem:[%s180 + $0x15] sm:$0xff] %v203
        %208 = vst [vmem:[%s180 + $0x1d] sm:$0x7] %v204
        %s209 = sand.u32 %s98, 1
        %s210 = scalar_lea.sflag [#allocation3], %s209
        %s211 = sand.u32 %s98, 1
        %s212 = smul.addr %s211, 32
        %s213 = scalar_lea.vmem [#allocation2], %s212
        // Predicated region
        $region33: #{tpu_custom_call.1} parent=31 // pred_check
          %p214 = pneg %p108
        $region34: #{tpu_custom_call.1} parent=31 // pred_check_branch
          %216 = sbr.rel (%p214) target = $region36
        $region35: #{tpu_custom_call.1} parent=31 // pred_region
          %s217 = smul.u32 2, %s17
          %s219 = ssub.s32 512, 512
          %220 = vsyncadd %s210, %s219
          %s221 = smul.addr %s217, 2
          %s222 = smul.addr %s221, 128
          %s223 = scalar_lea.hbm %s3, %s222
          %s224 = sshll.u32 %s213, 4
          %s225 = int_to_ptr.vmem [resolvable:$true] %s224
          %230 = dma.vmem_to_hbm [thread:$0]  %s225, 512, %s223, %s210, 128, 128, 8
        $region36: #{tpu_custom_call.1} parent=31 // pred_fallthru
          _
      $region32: #{tpu_custom_call.1} parent=5 // pred_fallthru
        _
      %p231 = scmp.le.s32.totalorder 2, %s12
      // Predicated region
      $region37: #{tpu_custom_call.1} parent=5 // pred_check
        %p232 = pneg %p231
      $region38: #{tpu_custom_call.1} parent=5 // pred_check_branch
        %234 = sbr.rel (%p232) target = $region40
      $region39: #{tpu_custom_call.1} parent=5 // pred_region
        %s235 = ssub.s32 %s12, 2
        // Predicated region
        $region41: #{tpu_custom_call.1} parent=39 // pred_check
          %p236 = pneg %p114
        $region42: #{tpu_custom_call.1} parent=39 // pred_check_branch
          %238 = sbr.rel (%p236) target = $region44
        $region43: #{tpu_custom_call.1} parent=39 // pred_region
          %s239 = sand.u32 %s99, 1
          %s240 = scalar_lea.sflag [#allocation3], %s239
          %s241 = sand.u32 %s99, 1
          %s242 = smul.addr %s241, 32
          %s243 = scalar_lea.vmem [#allocation2], %s242
          %244 = dma.done %s240, 512
        $region44: #{tpu_custom_call.1} parent=39 // pred_fallthru
          _
      $region40: #{tpu_custom_call.1} parent=5 // pred_fallthru
        _
    $region6: #{tpu_custom_call.1} parent=1 // loop_footer
      %s16 = sadd.s32 1, %s12
    $region7: #{tpu_custom_call.1} parent=1 // loop_footer_branch
      %11 = sbr.rel target = $region3
    $region8: #{tpu_custom_call.1} parent=1 // loop_exit
      _
    %245 = vsyncpa [#allocation3], 1
    %s246 = scalar_lea.sflag [#allocation3], 1
    %247 = vsyncpa %s246, 1

</llo_original>
